<compile_context>
chip_gen: v7x
topology: tpu7x:2x2x1
jax: 0.10.0
libtpu: 0.0.40
codegen_flags: <defaults>
</compile_context>

<pallas_src>
import functools

import jax
import jax.numpy as jnp
from jax.experimental import pallas as pl
from jax.experimental.pallas import tpu as pltpu


def _pad_to(n, m):
    return ((n + m - 1) // m) * m


def mlp_kernel(x_ref,
               w1_ref, b1_ref,
               w2_ref, b2_ref,
               w3_ref, b3_ref,
               w4_ref, b4_ref,
               o_ref):
    """Fused 4-layer MLP (3x Linear+ReLU + output Linear) on one row tile.

    Dots are bf16 x bf16 -> f32 accumulation on the MXU; bias-add and ReLU run
    in f32 on the VPU, then cast back to bf16 for the next dot.
    """
    x = x_ref[...]                                                       # bf16

    h = jnp.dot(x, w1_ref[...], preferred_element_type=jnp.float32) + b1_ref[...]
    h = jnp.maximum(h, 0.0).astype(jnp.bfloat16)

    h = jnp.dot(h, w2_ref[...], preferred_element_type=jnp.float32) + b2_ref[...]
    h = jnp.maximum(h, 0.0).astype(jnp.bfloat16)

    h = jnp.dot(h, w3_ref[...], preferred_element_type=jnp.float32) + b3_ref[...]
    h = jnp.maximum(h, 0.0).astype(jnp.bfloat16)

    out = jnp.dot(h, w4_ref[...], preferred_element_type=jnp.float32) + b4_ref[...]
    o_ref[...] = out.astype(o_ref.dtype)


def prepare_params(params, compute_dtype=jnp.bfloat16):
    """One-time weight prep (hoisted out of the forward path).

    Pads feature dims to lane multiples of 128, casts weights to bf16 for the
    MXU, keeps biases in f32 as (1, D) rows. Returns (prepared, (din, dout)).
    """
    (w1, b1), (w2, b2), (w3, b3), (w4, b4) = params
    input_dim, hidden_dim = w1.shape
    output_dim = w4.shape[1]
    d_in_p = _pad_to(input_dim, 128)
    d_out_p = _pad_to(output_dim, 128)

    w1_p = jnp.pad(w1, ((0, d_in_p - input_dim), (0, 0))).astype(compute_dtype)
    w2_p = w2.astype(compute_dtype)
    w3_p = w3.astype(compute_dtype)
    w4_p = jnp.pad(w4, ((0, 0), (0, d_out_p - output_dim))).astype(compute_dtype)

    b1_r = b1.reshape(1, hidden_dim).astype(jnp.float32)
    b2_r = b2.reshape(1, hidden_dim).astype(jnp.float32)
    b3_r = b3.reshape(1, hidden_dim).astype(jnp.float32)
    b4_p = jnp.pad(b4, (0, d_out_p - output_dim)).reshape(1, d_out_p).astype(jnp.float32)

    prepared = ((w1_p, b1_r), (w2_p, b2_r), (w3_p, b3_r), (w4_p, b4_p))
    return prepared, (int(input_dim), int(output_dim))


def _choose_row_tile(n_rows, row_tile):
    """Pick a sublane-aligned row tile that minimizes pad rows while keeping
    tiles no larger than `row_tile` (so the grid can split across cores)."""
    max_rt = max(8, min(row_tile, _pad_to(n_rows, 8)))
    num_tiles = -(-n_rows // max_rt)            # ceil
    rt = _pad_to(-(-n_rows // num_tiles), 8)    # ceil then sublane-align
    return rt, num_tiles


@functools.partial(jax.jit, static_argnames=("input_dim", "output_dim", "row_tile"))
def pose_prediction_forward(x, prepared, *, input_dim, output_dim, row_tile=512):
    """x: [batch, frame_length, input_dim] f32. Returns [batch, frame_length, output_dim] f32."""
    (w1, b1), (w2, b2), (w3, b3), (w4, b4) = prepared

    batch, frames, _ = x.shape
    d_in_p, hidden_dim = w1.shape
    d_out_p = w4.shape[1]

    n_rows = batch * frames
    rt, num_tiles = _choose_row_tile(n_rows, row_tile)
    n_rows_p = rt * num_tiles
    grid = (num_tiles,)

    x2d = x.reshape(n_rows, input_dim)
    x_p = jnp.pad(x2d, ((0, n_rows_p - n_rows), (0, d_in_p - input_dim))
                  ).astype(w1.dtype)

    # Weights / biases: constant index_map -> never re-fetched -> single buffer.
    def const_spec(shape):
        return pl.BlockSpec(shape, lambda i: (0, 0), pipeline_mode=pl.Buffered(1))

    flops = 2 * n_rows_p * (d_in_p * hidden_dim
                            + 2 * hidden_dim * hidden_dim
                            + hidden_dim * d_out_p)
    weight_bytes = sum(int(a.size) * a.dtype.itemsize
                       for a in (w1, b1, w2, b2, w3, b3, w4, b4))
    bytes_accessed = (int(x_p.size) * x_p.dtype.itemsize    # input
                      + n_rows_p * d_out_p * 4              # f32 output
                      + weight_bytes)

    out_p = pl.pallas_call(
        mlp_kernel,
        out_shape=jax.ShapeDtypeStruct((n_rows_p, d_out_p), jnp.float32),
        grid_spec=pltpu.PrefetchScalarGridSpec(
            num_scalar_prefetch=0,
            grid=grid,
            in_specs=[
                pl.BlockSpec((rt, d_in_p), lambda i: (i, 0)),                       # x tile
                const_spec((d_in_p, hidden_dim)), const_spec((1, hidden_dim)),      # W1,b1
                const_spec((hidden_dim, hidden_dim)), const_spec((1, hidden_dim)),  # W2,b2
                const_spec((hidden_dim, hidden_dim)), const_spec((1, hidden_dim)),  # W3,b3
                const_spec((hidden_dim, d_out_p)), const_spec((1, d_out_p)),        # W4,b4
            ],
            out_specs=pl.BlockSpec((rt, d_out_p), lambda i: (i, 0)),
        ),
        compiler_params=pltpu.CompilerParams(
            dimension_semantics=("parallel",)),
        cost_estimate=pl.CostEstimate(flops=flops,
                                      transcendentals=0,
                                      bytes_accessed=bytes_accessed),
    )(x_p, w1, b1, w2, b2, w3, b3, w4, b4)

    return out_p[:n_rows, :output_dim].reshape(batch, frames, output_dim)


def init_params(key, input_dim, hidden_dim, output_dim, num_layers=3):
    """Deterministic init matching nn.Linear shapes (stored as [in, out])."""
    dims = [(input_dim, hidden_dim)]
    dims += [(hidden_dim, hidden_dim)] * (num_layers - 1)
    dims += [(hidden_dim, output_dim)]
    params = []
    for (din, dout) in dims:
        key, kw, kb = jax.random.split(key, 3)
        bound = 1.0 / jnp.sqrt(din)
        w = jax.random.uniform(kw, (din, dout), jnp.float32, -bound, bound)
        b = jax.random.uniform(kb, (dout,), jnp.float32, -bound, bound)
        params.append((w, b))
    return params


def reference_forward_f32(x, params):
    """Full-precision pure-JAX reference."""
    batch, frames, din = x.shape
    h = x.reshape(batch * frames, din)
    for i, (w, b) in enumerate(params):
        h = h @ w + b
        if i < len(params) - 1:
            h = jnp.maximum(h, 0.0)
    return h.reshape(batch, frames, -1)


def reference_forward_bf16(x, params):
    """Pure-JAX reference mirroring the kernel arithmetic (bf16 dots, f32 acc)."""
    batch, frames, din = x.shape
    h = x.reshape(batch * frames, din).astype(jnp.bfloat16)
    for i, (w, b) in enumerate(params):
        acc = jnp.dot(h, w.astype(jnp.bfloat16),
                      preferred_element_type=jnp.float32) + b.astype(jnp.float32)
        if i < len(params) - 1:
            h = jnp.maximum(acc, 0.0).astype(jnp.bfloat16)
        else:
            h = acc
    return h.reshape(batch, frames, -1)


if __name__ == "__main__":
    # Small shapes consistent with the module defaults.
    batch = 2
    frame_length = 16
    input_dim = 72
    hidden_dim = 256
    output_dim = 72

    key = jax.random.PRNGKey(0)
    key, kx = jax.random.split(key)
    x = jax.random.normal(kx, (batch, frame_length, input_dim), jnp.float32)

    params = init_params(key, input_dim, hidden_dim, output_dim)
    prepared, (din, dout) = prepare_params(params)

    out = pose_prediction_forward(x, prepared, input_dim=din, output_dim=dout,
                                  row_tile=512)
    out = jax.block_until_ready(out)

    assert out.shape == (batch, frame_length, output_dim)

    # Exact-arithmetic check vs a bf16-mirroring reference (tight tolerance).
    ref_bf16 = reference_forward_bf16(x, params)
    assert jnp.allclose(out, ref_bf16, atol=5e-3, rtol=5e-3), "mismatch vs bf16 reference"

    # Sanity check vs the full-f32 reference (loose: bf16 quantization only).
    ref_f32 = reference_forward_f32(x, params)
    assert jnp.allclose(out, ref_f32, atol=1e-1, rtol=1e-1), "mismatch vs f32 reference"

    print("KERNEL_OK")
</pallas_src>

<mosaic_0001>
module attributes {stable_mosaic.version = 11 : i64} {
  func.func @mlp_kernel(%arg0: i32, %arg1: memref<32x128xbf16, #tpu.memory_space<vmem>>, %arg2: memref<128x256xbf16, #tpu.memory_space<vmem>>, %arg3: memref<1x256xf32, #tpu.memory_space<vmem>>, %arg4: memref<256x256xbf16, #tpu.memory_space<vmem>>, %arg5: memref<1x256xf32, #tpu.memory_space<vmem>>, %arg6: memref<256x256xbf16, #tpu.memory_space<vmem>>, %arg7: memref<1x256xf32, #tpu.memory_space<vmem>>, %arg8: memref<256x128xbf16, #tpu.memory_space<vmem>>, %arg9: memref<1x128xf32, #tpu.memory_space<vmem>>, %arg10: memref<32x128xf32, #tpu.memory_space<vmem>>) attributes {dimension_semantics = [#tpu.dimension_semantics<parallel>], iteration_bounds = array<i64: 1>, scalar_prefetch = 0 : i64, scratch_operands = 0 : i64, tpu.core_type = #tpu.core_type<tc>, window_params = [{transform_indices = @transform_0, window_bounds = array<i64: 32, 128>}, {pipeline_mode = #tpu.pipeline_mode<synchronous>, transform_indices = @transform_1, window_bounds = array<i64: 128, 256>}, {pipeline_mode = #tpu.pipeline_mode<synchronous>, transform_indices = @transform_2, window_bounds = array<i64: 1, 256>}, {pipeline_mode = #tpu.pipeline_mode<synchronous>, transform_indices = @transform_3, window_bounds = array<i64: 256, 256>}, {pipeline_mode = #tpu.pipeline_mode<synchronous>, transform_indices = @transform_4, window_bounds = array<i64: 1, 256>}, {pipeline_mode = #tpu.pipeline_mode<synchronous>, transform_indices = @transform_5, window_bounds = array<i64: 256, 256>}, {pipeline_mode = #tpu.pipeline_mode<synchronous>, transform_indices = @transform_6, window_bounds = array<i64: 1, 256>}, {pipeline_mode = #tpu.pipeline_mode<synchronous>, transform_indices = @transform_7, window_bounds = array<i64: 256, 128>}, {pipeline_mode = #tpu.pipeline_mode<synchronous>, transform_indices = @transform_8, window_bounds = array<i64: 1, 128>}, {transform_indices = @transform_9, window_bounds = array<i64: 32, 128>}]} {
    %c0 = arith.constant 0 : index
    %c0_0 = arith.constant 0 : index
    %0 = vector.load %arg1[%c0, %c0_0] : memref<32x128xbf16, #tpu.memory_space<vmem>>, vector<32x128xbf16>
    %c0_1 = arith.constant 0 : index
    %c0_2 = arith.constant 0 : index
    %1 = vector.load %arg2[%c0_1, %c0_2] : memref<128x256xbf16, #tpu.memory_space<vmem>>, vector<128x256xbf16>
    %cst = arith.constant dense<0.000000e+00> : vector<32x256xf32>
    %2 = tpu.matmul %0, %1, %cst {dimension_numbers = #tpu.dot_dimension_numbers<[1], [0], [0], [1], [0, 0, 1, 1], [], []>} : vector<32x128xbf16>, vector<128x256xbf16>, vector<32x256xf32> -> vector<32x256xf32>
    %c0_3 = arith.constant 0 : index
    %c0_4 = arith.constant 0 : index
    %3 = vector.load %arg3[%c0_3, %c0_4] : memref<1x256xf32, #tpu.memory_space<vmem>>, vector<1x256xf32>
    %4 = vector.broadcast %3 : vector<1x256xf32> to vector<32x256xf32>
    %5 = arith.addf %2, %4 : vector<32x256xf32>
    %cst_5 = arith.constant 0.000000e+00 : f32
    %6 = vector.broadcast %cst_5 : f32 to vector<32x256xf32>
    %7 = arith.maximumf %5, %6 : vector<32x256xf32>
    %8 = arith.truncf %7 : vector<32x256xf32> to vector<32x256xbf16>
    %c0_6 = arith.constant 0 : index
    %c0_7 = arith.constant 0 : index
    %9 = vector.load %arg4[%c0_6, %c0_7] : memref<256x256xbf16, #tpu.memory_space<vmem>>, vector<256x256xbf16>
    %cst_8 = arith.constant dense<0.000000e+00> : vector<32x256xf32>
    %10 = tpu.matmul %8, %9, %cst_8 {dimension_numbers = #tpu.dot_dimension_numbers<[1], [0], [0], [1], [0, 0, 1, 1], [], []>} : vector<32x256xbf16>, vector<256x256xbf16>, vector<32x256xf32> -> vector<32x256xf32>
    %c0_9 = arith.constant 0 : index
    %c0_10 = arith.constant 0 : index
    %11 = vector.load %arg5[%c0_9, %c0_10] : memref<1x256xf32, #tpu.memory_space<vmem>>, vector<1x256xf32>
    %12 = vector.broadcast %11 : vector<1x256xf32> to vector<32x256xf32>
    %13 = arith.addf %10, %12 : vector<32x256xf32>
    %cst_11 = arith.constant 0.000000e+00 : f32
    %14 = vector.broadcast %cst_11 : f32 to vector<32x256xf32>
    %15 = arith.maximumf %13, %14 : vector<32x256xf32>
    %16 = arith.truncf %15 : vector<32x256xf32> to vector<32x256xbf16>
    %c0_12 = arith.constant 0 : index
    %c0_13 = arith.constant 0 : index
    %17 = vector.load %arg6[%c0_12, %c0_13] : memref<256x256xbf16, #tpu.memory_space<vmem>>, vector<256x256xbf16>
    %cst_14 = arith.constant dense<0.000000e+00> : vector<32x256xf32>
    %18 = tpu.matmul %16, %17, %cst_14 {dimension_numbers = #tpu.dot_dimension_numbers<[1], [0], [0], [1], [0, 0, 1, 1], [], []>} : vector<32x256xbf16>, vector<256x256xbf16>, vector<32x256xf32> -> vector<32x256xf32>
    %c0_15 = arith.constant 0 : index
    %c0_16 = arith.constant 0 : index
    %19 = vector.load %arg7[%c0_15, %c0_16] : memref<1x256xf32, #tpu.memory_space<vmem>>, vector<1x256xf32>
    %20 = vector.broadcast %19 : vector<1x256xf32> to vector<32x256xf32>
    %21 = arith.addf %18, %20 : vector<32x256xf32>
    %cst_17 = arith.constant 0.000000e+00 : f32
    %22 = vector.broadcast %cst_17 : f32 to vector<32x256xf32>
    %23 = arith.maximumf %21, %22 : vector<32x256xf32>
    %24 = arith.truncf %23 : vector<32x256xf32> to vector<32x256xbf16>
    %c0_18 = arith.constant 0 : index
    %c0_19 = arith.constant 0 : index
    %25 = vector.load %arg8[%c0_18, %c0_19] : memref<256x128xbf16, #tpu.memory_space<vmem>>, vector<256x128xbf16>
    %cst_20 = arith.constant dense<0.000000e+00> : vector<32x128xf32>
    %26 = tpu.matmul %24, %25, %cst_20 {dimension_numbers = #tpu.dot_dimension_numbers<[1], [0], [0], [1], [0, 0, 1, 1], [], []>} : vector<32x256xbf16>, vector<256x128xbf16>, vector<32x128xf32> -> vector<32x128xf32>
    %c0_21 = arith.constant 0 : index
    %c0_22 = arith.constant 0 : index
    %27 = vector.load %arg9[%c0_21, %c0_22] : memref<1x128xf32, #tpu.memory_space<vmem>>, vector<1x128xf32>
    %28 = vector.broadcast %27 : vector<1x128xf32> to vector<32x128xf32>
    %29 = arith.addf %26, %28 : vector<32x128xf32>
    %c0_23 = arith.constant 0 : index
    %c0_24 = arith.constant 0 : index
    %30 = vector.load %arg10[%c0_23, %c0_24] : memref<32x128xf32, #tpu.memory_space<vmem>>, vector<32x128xf32>
    tpu.vector_store %arg10[%c0_23, %c0_24], %29 {strides = array<i32>} : memref<32x128xf32, #tpu.memory_space<vmem>>, vector<32x128xf32>,
    return
  }
  func.func @transform_0(%arg0: i32) -> (i32, i32) {
    %c0_i32 = arith.constant 0 : i32
    %c0_i32_0 = arith.constant 0 : i32
    return %arg0, %c0_i32 : i32, i32
  }
  func.func @transform_1(%arg0: i32) -> (i32, i32) {
    %c0_i32 = arith.constant 0 : i32
    %c0_i32_0 = arith.constant 0 : i32
    %c0_i32_1 = arith.constant 0 : i32
    return %c0_i32, %c0_i32_0 : i32, i32
  }
  func.func @transform_2(%arg0: i32) -> (i32, i32) {
    %c0_i32 = arith.constant 0 : i32
    %c0_i32_0 = arith.constant 0 : i32
    %c0_i32_1 = arith.constant 0 : i32
    return %c0_i32, %c0_i32_0 : i32, i32
  }
  func.func @transform_3(%arg0: i32) -> (i32, i32) {
    %c0_i32 = arith.constant 0 : i32
    %c0_i32_0 = arith.constant 0 : i32
    %c0_i32_1 = arith.constant 0 : i32
    return %c0_i32, %c0_i32_0 : i32, i32
  }
  func.func @transform_4(%arg0: i32) -> (i32, i32) {
    %c0_i32 = arith.constant 0 : i32
    %c0_i32_0 = arith.constant 0 : i32
    %c0_i32_1 = arith.constant 0 : i32
    return %c0_i32, %c0_i32_0 : i32, i32
  }
  func.func @transform_5(%arg0: i32) -> (i32, i32) {
    %c0_i32 = arith.constant 0 : i32
    %c0_i32_0 = arith.constant 0 : i32
    %c0_i32_1 = arith.constant 0 : i32
    return %c0_i32, %c0_i32_0 : i32, i32
  }
  func.func @transform_6(%arg0: i32) -> (i32, i32) {
    %c0_i32 = arith.constant 0 : i32
    %c0_i32_0 = arith.constant 0 : i32
    %c0_i32_1 = arith.constant 0 : i32
    return %c0_i32, %c0_i32_0 : i32, i32
  }
  func.func @transform_7(%arg0: i32) -> (i32, i32) {
    %c0_i32 = arith.constant 0 : i32
    %c0_i32_0 = arith.constant 0 : i32
    %c0_i32_1 = arith.constant 0 : i32
    return %c0_i32, %c0_i32_0 : i32, i32
  }
  func.func @transform_8(%arg0: i32) -> (i32, i32) {
    %c0_i32 = arith.constant 0 : i32
    %c0_i32_0 = arith.constant 0 : i32
    %c0_i32_1 = arith.constant 0 : i32
    return %c0_i32, %c0_i32_0 : i32, i32
  }
  func.func @transform_9(%arg0: i32) -> (i32, i32) {
    %c0_i32 = arith.constant 0 : i32
    %c0_i32_0 = arith.constant 0 : i32
    return %arg0, %c0_i32 : i32, i32
  }
}

</mosaic_0001>

<llo_original>
// kernel: pose_prediction_forward.1
$region0: #{pose_prediction_forward.1}
  #allocation0 [shape = 'u32[]', space=smem, size = 0x4, offset = 0x4, fixed_abs, tag = 'smem constant byte address 0x4 - core index']
  #allocation1 [shape = 'u32[144,128]{1,0:T(1,128)}', space=vmem, size = 0x12000, scoped, tag = 'internal scratch']
  %s0 = inlined_call_operand.vmem [shape: bf16[32,128], index: 0, kind: input, shape index: {}]
  %s1 = inlined_call_operand.hbm [shape: bf16[128,256], index: 1, kind: input, shape index: {}]
  %s2 = inlined_call_operand.vmem [shape: f32[1,256], index: 2, kind: input, shape index: {}]
  %s3 = inlined_call_operand.hbm [shape: bf16[256,256], index: 3, kind: input, shape index: {}]
  %s4 = inlined_call_operand.vmem [shape: f32[1,256], index: 4, kind: input, shape index: {}]
  %s5 = inlined_call_operand.hbm [shape: bf16[256,256], index: 5, kind: input, shape index: {}]
  %s6 = inlined_call_operand.vmem [shape: f32[1,256], index: 6, kind: input, shape index: {}]
  %s7 = inlined_call_operand.hbm [shape: bf16[256,128], index: 7, kind: input, shape index: {}]
  %s8 = inlined_call_operand.vmem [shape: f32[1,128], index: 8, kind: input, shape index: {}]
  %s9 = inlined_call_operand.hbm [shape: f32[32,128], index: 9, kind: output, shape index: {}]
  %s10 = sld [smem:[#allocation0]]
  $region62: #{pose_prediction_forward.1} parent=0
    _
  %s12 = ssub.s32 1, %s10
  %s13 = scalar_select 0, %s12, %s10
  $region1: #{pose_prediction_forward.1} parent=0
    #allocation2 [shape = 'u8[65536]{0}', space=vmem, size = 0x10000, scoped, tag = 'input window, operand 1, single buffered']
    #allocation3 [shape = 's32[1]{0}', space=sflag, size = 0x4, scoped, tag = 'scoped memory for pose_prediction_forward.1']
    #allocation4 [shape = 's32[1]{0}', space=sflag, size = 0x4, scoped, tag = 'scoped memory for pose_prediction_forward.1']
    #allocation5 [shape = 'u8[131072]{0}', space=vmem, size = 0x20000, scoped, tag = 'input window, operand 3, single buffered']
    #allocation6 [shape = 's32[1]{0}', space=sflag, size = 0x4, scoped, tag = 'scoped memory for pose_prediction_forward.1']
    #allocation7 [shape = 'u8[131072]{0}', space=vmem, size = 0x20000, scoped, tag = 'input window, operand 5, single buffered']
    #allocation8 [shape = 'u8[65536]{0}', space=vmem, size = 0x10000, scoped, tag = 'input window, operand 7, single buffered']
    #allocation9 [shape = 's32[1]{0}', space=sflag, size = 0x4, scoped, tag = 'scoped memory for pose_prediction_forward.1']
    #allocation10 [shape = 'u8[16384]{0}', space=vmem, size = 0x4000, scoped, tag = 'output window, operand 0, single buffered']
    %14 = vsyncpa [#allocation3], 0
    %15 = vsyncpa [#allocation6], 0
    %16 = vsyncpa [#allocation9], 0
    %17 = vsyncpa [#allocation4], 0
    // Predicated region
    $region2: #{pose_prediction_forward.1} parent=1 // pred_check
      _
    $region3: #{pose_prediction_forward.1} parent=1 // pred_check_branch
      %19 = sbr.rel (0) target = $region5
    $region4: #{pose_prediction_forward.1} parent=1 // pred_region
      _
    $region5: #{pose_prediction_forward.1} parent=1 // pred_fallthru
      _
    // Predicated region
    $region6: #{pose_prediction_forward.1} parent=1 // pred_check
      _
    $region7: #{pose_prediction_forward.1} parent=1 // pred_check_branch
      %21 = sbr.rel (0) target = $region9
    $region8: #{pose_prediction_forward.1} parent=1 // pred_region
      %s23 = ssub.s32 2048, 2048
      %24 = vsyncadd [#allocation3], %s23
      %s25 = sshll.u32 [#allocation2], 4
      %s26 = int_to_ptr.vmem [resolvable:$true] %s25
      %31 = dma.hbm_to_vmem [thread:$0]  %s1, 2048, %s26, [#allocation3], 128, 128, 8
    $region9: #{pose_prediction_forward.1} parent=1 // pred_fallthru
      _
    // Predicated region
    $region10: #{pose_prediction_forward.1} parent=1 // pred_check
      _
    $region11: #{pose_prediction_forward.1} parent=1 // pred_check_branch
      %33 = sbr.rel (0) target = $region13
    $region12: #{pose_prediction_forward.1} parent=1 // pred_region
      _
    $region13: #{pose_prediction_forward.1} parent=1 // pred_fallthru
      _
    // Predicated region
    $region14: #{pose_prediction_forward.1} parent=1 // pred_check
      _
    $region15: #{pose_prediction_forward.1} parent=1 // pred_check_branch
      %35 = sbr.rel (0) target = $region17
    $region16: #{pose_prediction_forward.1} parent=1 // pred_region
      %s37 = ssub.s32 4096, 4096
      %38 = vsyncadd [#allocation6], %s37
      %s39 = sshll.u32 [#allocation5], 4
      %s40 = int_to_ptr.vmem [resolvable:$true] %s39
      %45 = dma.hbm_to_vmem [thread:$0]  %s3, 4096, %s40, [#allocation6], 128, 128, 8
    $region17: #{pose_prediction_forward.1} parent=1 // pred_fallthru
      _
    // Predicated region
    $region18: #{pose_prediction_forward.1} parent=1 // pred_check
      _
    $region19: #{pose_prediction_forward.1} parent=1 // pred_check_branch
      %47 = sbr.rel (0) target = $region21
    $region20: #{pose_prediction_forward.1} parent=1 // pred_region
      _
    $region21: #{pose_prediction_forward.1} parent=1 // pred_fallthru
      _
    // Predicated region
    $region22: #{pose_prediction_forward.1} parent=1 // pred_check
      _
    $region23: #{pose_prediction_forward.1} parent=1 // pred_check_branch
      %49 = sbr.rel (0) target = $region25
    $region24: #{pose_prediction_forward.1} parent=1 // pred_region
      %s51 = ssub.s32 4096, 4096
      %52 = vsyncadd [#allocation6], %s51
      %s53 = sshll.u32 [#allocation7], 4
      %s54 = int_to_ptr.vmem [resolvable:$true] %s53
      %59 = dma.hbm_to_vmem [thread:$0]  %s5, 4096, %s54, [#allocation6], 128, 128, 8
    $region25: #{pose_prediction_forward.1} parent=1 // pred_fallthru
      _
    // Predicated region
    $region26: #{pose_prediction_forward.1} parent=1 // pred_check
      _
    $region27: #{pose_prediction_forward.1} parent=1 // pred_check_branch
      %61 = sbr.rel (0) target = $region29
    $region28: #{pose_prediction_forward.1} parent=1 // pred_region
      _
    $region29: #{pose_prediction_forward.1} parent=1 // pred_fallthru
      _
    // Predicated region
    $region30: #{pose_prediction_forward.1} parent=1 // pred_check
      _
    $region31: #{pose_prediction_forward.1} parent=1 // pred_check_branch
      %63 = sbr.rel (0) target = $region33
    $region32: #{pose_prediction_forward.1} parent=1 // pred_region
      %s65 = ssub.s32 2048, 2048
      %66 = vsyncadd [#allocation9], %s65
      %s67 = sshll.u32 [#allocation8], 4
      %s68 = int_to_ptr.vmem [resolvable:$true] %s67
      %73 = dma.hbm_to_vmem [thread:$0]  %s7, 2048, %s68, [#allocation9], 64, 64, 4
    $region33: #{pose_prediction_forward.1} parent=1 // pred_fallthru
      _
    // Predicated region
    $region34: #{pose_prediction_forward.1} parent=1 // pred_check
      _
    $region35: #{pose_prediction_forward.1} parent=1 // pred_check_branch
      %75 = sbr.rel (0) target = $region37
    $region36: #{pose_prediction_forward.1} parent=1 // pred_region
      _
    $region37: #{pose_prediction_forward.1} parent=1 // pred_fallthru
      _
    // Predicated region
    $region38: #{pose_prediction_forward.1} parent=1 // pred_check
      _
    $region39: #{pose_prediction_forward.1} parent=1 // pred_check_branch
      %77 = sbr.rel (0) target = $region41
    $region40: #{pose_prediction_forward.1} parent=1 // pred_region
      %78 = dma.done [#allocation3], 2048
    $region41: #{pose_prediction_forward.1} parent=1 // pred_fallthru
      _
    // Predicated region
    $region42: #{pose_prediction_forward.1} parent=1 // pred_check
      _
    $region43: #{pose_prediction_forward.1} parent=1 // pred_check_branch
      %80 = sbr.rel (0) target = $region45
    $region44: #{pose_prediction_forward.1} parent=1 // pred_region
      %81 = dma.done [#allocation6], 4096
    $region45: #{pose_prediction_forward.1} parent=1 // pred_fallthru
      _
    // Predicated region
    $region46: #{pose_prediction_forward.1} parent=1 // pred_check
      _
    $region47: #{pose_prediction_forward.1} parent=1 // pred_check_branch
      %83 = sbr.rel (0) target = $region49
    $region48: #{pose_prediction_forward.1} parent=1 // pred_region
      %84 = dma.done [#allocation6], 4096
    $region49: #{pose_prediction_forward.1} parent=1 // pred_fallthru
      _
    // Predicated region
    $region50: #{pose_prediction_forward.1} parent=1 // pred_check
      _
    $region51: #{pose_prediction_forward.1} parent=1 // pred_check_branch
      %86 = sbr.rel (0) target = $region53
    $region52: #{pose_prediction_forward.1} parent=1 // pred_region
      %87 = dma.done [#allocation9], 2048
    $region53: #{pose_prediction_forward.1} parent=1 // pred_fallthru
      _
    %v89 = vld [vmem:[%s0] sm:$0xf]
    %v90 = vld [vmem:[%s0 + $0x4] sm:$0xf]
    %v91 = vld [vmem:[%s0 + $0x8] sm:$0xf]
    %v92 = vld [vmem:[%s0 + $0xc] sm:$0xf]
    %v93 = vld [vmem:[#allocation2] sm:$0xff]
    %v94 = vld [vmem:[#allocation2 + $0x8] sm:$0xff]
    %v95 = vld [vmem:[#allocation2 + $0x10] sm:$0xff]
    %v96 = vld [vmem:[#allocation2 + $0x18] sm:$0xff]
    %v97 = vld [vmem:[#allocation2 + $0x20] sm:$0xff]
    %v98 = vld [vmem:[#allocation2 + $0x28] sm:$0xff]
    %v99 = vld [vmem:[#allocation2 + $0x30] sm:$0xff]
    %v100 = vld [vmem:[#allocation2 + $0x38] sm:$0xff]
    %v101 = vld [vmem:[#allocation2 + $0x40] sm:$0xff]
    %v102 = vld [vmem:[#allocation2 + $0x48] sm:$0xff]
    %v103 = vld [vmem:[#allocation2 + $0x50] sm:$0xff]
    %v104 = vld [vmem:[#allocation2 + $0x58] sm:$0xff]
    %v105 = vld [vmem:[#allocation2 + $0x60] sm:$0xff]
    %v106 = vld [vmem:[#allocation2 + $0x68] sm:$0xff]
    %v107 = vld [vmem:[#allocation2 + $0x70] sm:$0xff]
    %v108 = vld [vmem:[#allocation2 + $0x78] sm:$0xff]
    %v109 = vld [vmem:[%s2] sm:$0x3]
    %v111 = vlaneseq
    %v112 = vshrl.u32 %v111, 7
    %v113 = vsub.s32 0, %v112
    %v114 = vrot.slane %v109, %v113
    %v115 = vlaneseq
    %v116 = vshrl.u32 %v115, 7
    %v117 = vsub.s32 1, %v116
    %v118 = vrot.slane %v109, %v117
    %v125 = vunpack.c.l.b16 %v89
    %v126 = vunpack.c.l.b16 %v90
    %v127 = vunpack.c.l.b16 %v91
    %v128 = vunpack.c.l.b16 %v92
    %v129 = vpack.c.b16 %v126, %v125
    %v130 = vpack.c.b16 %v128, %v127
    %v149 = vunpack.c.l.b16 %v93
    %v150 = vunpack.c.h.b16 %v93
    %v151 = vunpack.c.l.b16 %v94
    %v152 = vunpack.c.h.b16 %v94
    %v153 = vunpack.c.l.b16 %v95
    %v154 = vunpack.c.h.b16 %v95
    %v155 = vunpack.c.l.b16 %v96
    %v156 = vunpack.c.h.b16 %v96
    %v157 = vunpack.c.l.b16 %v97
    %v158 = vunpack.c.h.b16 %v97
    %v159 = vunpack.c.l.b16 %v98
    %v160 = vunpack.c.h.b16 %v98
    %v161 = vunpack.c.l.b16 %v99
    %v162 = vunpack.c.h.b16 %v99
    %v163 = vunpack.c.l.b16 %v100
    %v164 = vunpack.c.h.b16 %v100
    %v165 = vunpack.c.l.b16 %v101
    %v166 = vunpack.c.h.b16 %v101
    %v167 = vunpack.c.l.b16 %v102
    %v168 = vunpack.c.h.b16 %v102
    %v169 = vunpack.c.l.b16 %v103
    %v170 = vunpack.c.h.b16 %v103
    %v171 = vunpack.c.l.b16 %v104
    %v172 = vunpack.c.h.b16 %v104
    %v173 = vunpack.c.l.b16 %v105
    %v174 = vunpack.c.h.b16 %v105
    %v175 = vunpack.c.l.b16 %v106
    %v176 = vunpack.c.h.b16 %v106
    %v177 = vunpack.c.l.b16 %v107
    %v178 = vunpack.c.h.b16 %v107
    %v179 = vunpack.c.l.b16 %v108
    %v180 = vunpack.c.h.b16 %v108
    %v181 = vpack.c.b16 %v151, %v149
    %v182 = vpack.c.b16 %v152, %v150
    %v183 = vpack.c.b16 %v155, %v153
    %v184 = vpack.c.b16 %v156, %v154
    %v185 = vpack.c.b16 %v159, %v157
    %v186 = vpack.c.b16 %v160, %v158
    %v187 = vpack.c.b16 %v163, %v161
    %v188 = vpack.c.b16 %v164, %v162
    %v189 = vpack.c.b16 %v167, %v165
    %v190 = vpack.c.b16 %v168, %v166
    %v191 = vpack.c.b16 %v171, %v169
    %v192 = vpack.c.b16 %v172, %v170
    %v193 = vpack.c.b16 %v175, %v173
    %v194 = vpack.c.b16 %v176, %v174
    %v195 = vpack.c.b16 %v179, %v177
    %v196 = vpack.c.b16 %v180, %v178
    %213 = vmatprep.subr.bf16.mxu0 %v182
    %214 = vmatpush1.bf16.msra.mxu0 %v181
    %215 = vmatprep.subr.bf16.mxu0 %v184
    %216 = vmatpush1.bf16.msra.mxu0 %v183
    %217 = vmatprep.subr.bf16.mxu0 %v186
    %218 = vmatpush1.bf16.msra.mxu0 %v185
    %219 = vmatprep.subr.bf16.mxu0 %v188
    %220 = vmatpush1.bf16.msra.mxu0 %v187
    %221 = vmatprep.subr.bf16.mxu0 %v190
    %222 = vmatpush1.bf16.msra.mxu0 %v189
    %223 = vmatprep.subr.bf16.mxu0 %v192
    %224 = vmatpush1.bf16.msra.mxu0 %v191
    %225 = vmatprep.subr.bf16.mxu0 %v194
    %226 = vmatpush1.bf16.msra.mxu0 %v193
    %227 = vmatprep.subr.bf16.mxu0 %v196
    %228 = vmatpush1.bf16.msra.mxu0 %v195
    %229 = vmatprep.subr.bf16.mxu0 0
    %230 = vmatpush1.bf16.msra.mxu0 0
    %231 = vmatprep.subr.bf16.mxu0 0
    %232 = vmatpush1.bf16.msra.mxu0 0
    %233 = vmatprep.subr.bf16.mxu0 0
    %234 = vmatpush1.bf16.msra.mxu0 0
    %235 = vmatprep.subr.bf16.mxu0 0
    %236 = vmatpush1.bf16.msra.mxu0 0
    %237 = vmatprep.subr.bf16.mxu0 0
    %238 = vmatpush1.bf16.msra.mxu0 0
    %239 = vmatprep.subr.bf16.mxu0 0
    %240 = vmatpush1.bf16.msra.mxu0 0
    %241 = vmatprep.subr.bf16.mxu0 0
    %242 = vmatpush1.bf16.msra.mxu0 0
    %243 = vmatprep.subr.bf16.mxu0 0
    %244 = vmatpush1.bf16.msra.mxu0 0
    %245 = vmatprep.mubr.bf16.mxu0 0
    %246 = vmatmul.mubr.bf16.gmra.mrb[0].mxu0 %v129
    %v247 = vpop.f32.mrb[0].mxu0
    %v248 = vadd.f32 %v114, %v247
    %v249 = vpop.f32.mrb[0].mxu0
    %v250 = vadd.f32 %v118, %v249
    %v251 = vpop.f32.mrb[0].mxu0
    %v252 = vadd.f32 %v114, %v251
    %v253 = vpop.f32.mrb[0].mxu0
    %v254 = vadd.f32 %v118, %v253
    %255 = vmatprep.mubr.bf16.mxu0 0
    %256 = vmatmul.mubr.bf16.gmra.mrb[0].mxu0 %v130
    %v257 = vpop.f32.mrb[0].mxu0
    %v258 = vadd.f32 %v114, %v257
    %v259 = vpop.f32.mrb[0].mxu0
    %v260 = vadd.f32 %v118, %v259
    %v261 = vpop.f32.mrb[0].mxu0
    %v262 = vadd.f32 %v114, %v261
    %v263 = vpop.f32.mrb[0].mxu0
    %v264 = vadd.f32 %v118, %v263
    %265 = vdwg.mxu0
    %v266 = vmax.f32 %v248, 0.0
    %v267 = vmax.f32 %v250, 0.0
    %v268 = vmax.f32 %v252, 0.0
    %v269 = vmax.f32 %v254, 0.0
    %v270 = vmax.f32 %v258, 0.0
    %v271 = vmax.f32 %v260, 0.0
    %v272 = vmax.f32 %v262, 0.0
    %v273 = vmax.f32 %v264, 0.0
    %v274 = vpack.c.bf16 %v268, %v266
    %v275 = vpack.c.bf16 %v269, %v267
    %v276 = vpack.c.bf16 %v272, %v270
    %v277 = vpack.c.bf16 %v273, %v271
    %v278 = vld [vmem:[#allocation5] sm:$0xff]
    %v279 = vld [vmem:[#allocation5 + $0x8] sm:$0xff]
    %v280 = vld [vmem:[#allocation5 + $0x10] sm:$0xff]
    %v281 = vld [vmem:[#allocation5 + $0x18] sm:$0xff]
    %v282 = vld [vmem:[#allocation5 + $0x20] sm:$0xff]
    %v283 = vld [vmem:[#allocation5 + $0x28] sm:$0xff]
    %v284 = vld [vmem:[#allocation5 + $0x30] sm:$0xff]
    %v285 = vld [vmem:[#allocation5 + $0x38] sm:$0xff]
    %v286 = vld [vmem:[#allocation5 + $0x40] sm:$0xff]
    %v287 = vld [vmem:[#allocation5 + $0x48] sm:$0xff]
    %v288 = vld [vmem:[#allocation5 + $0x50] sm:$0xff]
    %v289 = vld [vmem:[#allocation5 + $0x58] sm:$0xff]
    %v290 = vld [vmem:[#allocation5 + $0x60] sm:$0xff]
    %v291 = vld [vmem:[#allocation5 + $0x68] sm:$0xff]
    %v292 = vld [vmem:[#allocation5 + $0x70] sm:$0xff]
    %v293 = vld [vmem:[#allocation5 + $0x78] sm:$0xff]
    %v294 = vld [vmem:[#allocation5 + $0x80] sm:$0xff]
    %v295 = vld [vmem:[#allocation5 + $0x88] sm:$0xff]
    %v296 = vld [vmem:[#allocation5 + $0x90] sm:$0xff]
    %v297 = vld [vmem:[#allocation5 + $0x98] sm:$0xff]
    %v298 = vld [vmem:[#allocation5 + $0xa0] sm:$0xff]
    %v299 = vld [vmem:[#allocation5 + $0xa8] sm:$0xff]
    %v300 = vld [vmem:[#allocation5 + $0xb0] sm:$0xff]
    %v301 = vld [vmem:[#allocation5 + $0xb8] sm:$0xff]
    %v302 = vld [vmem:[#allocation5 + $0xc0] sm:$0xff]
    %v303 = vld [vmem:[#allocation5 + $0xc8] sm:$0xff]
    %v304 = vld [vmem:[#allocation5 + $0xd0] sm:$0xff]
    %v305 = vld [vmem:[#allocation5 + $0xd8] sm:$0xff]
    %v306 = vld [vmem:[#allocation5 + $0xe0] sm:$0xff]
    %v307 = vld [vmem:[#allocation5 + $0xe8] sm:$0xff]
    %v308 = vld [vmem:[#allocation5 + $0xf0] sm:$0xff]
    %v309 = vld [vmem:[#allocation5 + $0xf8] sm:$0xff]
    %v310 = vld [vmem:[%s4] sm:$0x3]
    %v312 = vlaneseq
    %v313 = vshrl.u32 %v312, 7
    %v314 = vsub.s32 0, %v313
    %v315 = vrot.slane %v310, %v314
    %v316 = vlaneseq
    %v317 = vshrl.u32 %v316, 7
    %v318 = vsub.s32 1, %v317
    %v319 = vrot.slane %v310, %v318
    %v354 = vunpack.c.l.b16 %v278
    %v355 = vunpack.c.h.b16 %v278
    %v356 = vunpack.c.l.b16 %v279
    %v357 = vunpack.c.h.b16 %v279
    %v358 = vunpack.c.l.b16 %v280
    %v359 = vunpack.c.h.b16 %v280
    %v360 = vunpack.c.l.b16 %v281
    %v361 = vunpack.c.h.b16 %v281
    %v362 = vunpack.c.l.b16 %v282
    %v363 = vunpack.c.h.b16 %v282
    %v364 = vunpack.c.l.b16 %v283
    %v365 = vunpack.c.h.b16 %v283
    %v366 = vunpack.c.l.b16 %v284
    %v367 = vunpack.c.h.b16 %v284
    %v368 = vunpack.c.l.b16 %v285
    %v369 = vunpack.c.h.b16 %v285
    %v370 = vunpack.c.l.b16 %v286
    %v371 = vunpack.c.h.b16 %v286
    %v372 = vunpack.c.l.b16 %v287
    %v373 = vunpack.c.h.b16 %v287
    %v374 = vunpack.c.l.b16 %v288
    %v375 = vunpack.c.h.b16 %v288
    %v376 = vunpack.c.l.b16 %v289
    %v377 = vunpack.c.h.b16 %v289
    %v378 = vunpack.c.l.b16 %v290
    %v379 = vunpack.c.h.b16 %v290
    %v380 = vunpack.c.l.b16 %v291
    %v381 = vunpack.c.h.b16 %v291
    %v382 = vunpack.c.l.b16 %v292
    %v383 = vunpack.c.h.b16 %v292
    %v384 = vunpack.c.l.b16 %v293
    %v385 = vunpack.c.h.b16 %v293
    %v386 = vunpack.c.l.b16 %v294
    %v387 = vunpack.c.h.b16 %v294
    %v388 = vunpack.c.l.b16 %v295
    %v389 = vunpack.c.h.b16 %v295
    %v390 = vunpack.c.l.b16 %v296
    %v391 = vunpack.c.h.b16 %v296
    %v392 = vunpack.c.l.b16 %v297
    %v393 = vunpack.c.h.b16 %v297
    %v394 = vunpack.c.l.b16 %v298
    %v395 = vunpack.c.h.b16 %v298
    %v396 = vunpack.c.l.b16 %v299
    %v397 = vunpack.c.h.b16 %v299
    %v398 = vunpack.c.l.b16 %v300
    %v399 = vunpack.c.h.b16 %v300
    %v400 = vunpack.c.l.b16 %v301
    %v401 = vunpack.c.h.b16 %v301
    %v402 = vunpack.c.l.b16 %v302
    %v403 = vunpack.c.h.b16 %v302
    %v404 = vunpack.c.l.b16 %v303
    %v405 = vunpack.c.h.b16 %v303
    %v406 = vunpack.c.l.b16 %v304
    %v407 = vunpack.c.h.b16 %v304
    %v408 = vunpack.c.l.b16 %v305
    %v409 = vunpack.c.h.b16 %v305
    %v410 = vunpack.c.l.b16 %v306
    %v411 = vunpack.c.h.b16 %v306
    %v412 = vunpack.c.l.b16 %v307
    %v413 = vunpack.c.h.b16 %v307
    %v414 = vunpack.c.l.b16 %v308
    %v415 = vunpack.c.h.b16 %v308
    %v416 = vunpack.c.l.b16 %v309
    %v417 = vunpack.c.h.b16 %v309
    %v418 = vpack.c.b16 %v356, %v354
    %v419 = vpack.c.b16 %v357, %v355
    %v420 = vpack.c.b16 %v360, %v358
    %v421 = vpack.c.b16 %v361, %v359
    %v422 = vpack.c.b16 %v364, %v362
    %v423 = vpack.c.b16 %v365, %v363
    %v424 = vpack.c.b16 %v368, %v366
    %v425 = vpack.c.b16 %v369, %v367
    %v426 = vpack.c.b16 %v372, %v370
    %v427 = vpack.c.b16 %v373, %v371
    %v428 = vpack.c.b16 %v376, %v374
    %v429 = vpack.c.b16 %v377, %v375
    %v430 = vpack.c.b16 %v380, %v378
    %v431 = vpack.c.b16 %v381, %v379
    %v432 = vpack.c.b16 %v384, %v382
    %v433 = vpack.c.b16 %v385, %v383
    %v434 = vpack.c.b16 %v388, %v386
    %v435 = vpack.c.b16 %v389, %v387
    %v436 = vpack.c.b16 %v392, %v390
    %v437 = vpack.c.b16 %v393, %v391
    %v438 = vpack.c.b16 %v396, %v394
    %v439 = vpack.c.b16 %v397, %v395
    %v440 = vpack.c.b16 %v400, %v398
    %v441 = vpack.c.b16 %v401, %v399
    %v442 = vpack.c.b16 %v404, %v402
    %v443 = vpack.c.b16 %v405, %v403
    %v444 = vpack.c.b16 %v408, %v406
    %v445 = vpack.c.b16 %v409, %v407
    %v446 = vpack.c.b16 %v412, %v410
    %v447 = vpack.c.b16 %v413, %v411
    %v448 = vpack.c.b16 %v416, %v414
    %v449 = vpack.c.b16 %v417, %v415
    %482 = vmatprep.subr.bf16.mxu0 %v419
    %483 = vmatpush1.bf16.msra.mxu0 %v418
    %484 = vmatprep.subr.bf16.mxu0 %v421
    %485 = vmatpush1.bf16.msra.mxu0 %v420
    %486 = vmatprep.subr.bf16.mxu0 %v423
    %487 = vmatpush1.bf16.msra.mxu0 %v422
    %488 = vmatprep.subr.bf16.mxu0 %v425
    %489 = vmatpush1.bf16.msra.mxu0 %v424
    %490 = vmatprep.subr.bf16.mxu0 %v427
    %491 = vmatpush1.bf16.msra.mxu0 %v426
    %492 = vmatprep.subr.bf16.mxu0 %v429
    %493 = vmatpush1.bf16.msra.mxu0 %v428
    %494 = vmatprep.subr.bf16.mxu0 %v431
    %495 = vmatpush1.bf16.msra.mxu0 %v430
    %496 = vmatprep.subr.bf16.mxu0 %v433
    %497 = vmatpush1.bf16.msra.mxu0 %v432
    %498 = vmatprep.subr.bf16.mxu0 %v435
    %499 = vmatpush1.bf16.msra.mxu0 %v434
    %500 = vmatprep.subr.bf16.mxu0 %v437
    %501 = vmatpush1.bf16.msra.mxu0 %v436
    %502 = vmatprep.subr.bf16.mxu0 %v439
    %503 = vmatpush1.bf16.msra.mxu0 %v438
    %504 = vmatprep.subr.bf16.mxu0 %v441
    %505 = vmatpush1.bf16.msra.mxu0 %v440
    %506 = vmatprep.subr.bf16.mxu0 %v443
    %507 = vmatpush1.bf16.msra.mxu0 %v442
    %508 = vmatprep.subr.bf16.mxu0 %v445
    %509 = vmatpush1.bf16.msra.mxu0 %v444
    %510 = vmatprep.subr.bf16.mxu0 %v447
    %511 = vmatpush1.bf16.msra.mxu0 %v446
    %512 = vmatprep.subr.bf16.mxu0 %v449
    %513 = vmatpush1.bf16.msra.mxu0 %v448
    %514 = vmatprep.mubr.bf16.mxu0 %v275
    %515 = vmatmul.mubr.bf16.gmra.mrb[0].mxu0 %v274
    %v516 = vpop.f32.mrb[0].mxu0
    %v517 = vadd.f32 %v315, %v516
    %v518 = vpop.f32.mrb[0].mxu0
    %v519 = vadd.f32 %v319, %v518
    %v520 = vpop.f32.mrb[0].mxu0
    %v521 = vadd.f32 %v315, %v520
    %v522 = vpop.f32.mrb[0].mxu0
    %v523 = vadd.f32 %v319, %v522
    %524 = vmatprep.mubr.bf16.mxu0 %v277
    %525 = vmatmul.mubr.bf16.gmra.mrb[0].mxu0 %v276
    %v526 = vpop.f32.mrb[0].mxu0
    %v527 = vadd.f32 %v315, %v526
    %v528 = vpop.f32.mrb[0].mxu0
    %v529 = vadd.f32 %v319, %v528
    %v530 = vpop.f32.mrb[0].mxu0
    %v531 = vadd.f32 %v315, %v530
    %v532 = vpop.f32.mrb[0].mxu0
    %v533 = vadd.f32 %v319, %v532
    %534 = vdwg.mxu0
    %v535 = vmax.f32 %v517, 0.0
    %v536 = vmax.f32 %v519, 0.0
    %v537 = vmax.f32 %v521, 0.0
    %v538 = vmax.f32 %v523, 0.0
    %v539 = vmax.f32 %v527, 0.0
    %v540 = vmax.f32 %v529, 0.0
    %v541 = vmax.f32 %v531, 0.0
    %v542 = vmax.f32 %v533, 0.0
    %v543 = vpack.c.bf16 %v537, %v535
    %v544 = vpack.c.bf16 %v538, %v536
    %v545 = vpack.c.bf16 %v541, %v539
    %v546 = vpack.c.bf16 %v542, %v540
    %v547 = vld [vmem:[#allocation7] sm:$0xff]
    %v548 = vld [vmem:[#allocation7 + $0x8] sm:$0xff]
    %v549 = vld [vmem:[#allocation7 + $0x10] sm:$0xff]
    %v550 = vld [vmem:[#allocation7 + $0x18] sm:$0xff]
    %v551 = vld [vmem:[#allocation7 + $0x20] sm:$0xff]
    %v552 = vld [vmem:[#allocation7 + $0x28] sm:$0xff]
    %v553 = vld [vmem:[#allocation7 + $0x30] sm:$0xff]
    %v554 = vld [vmem:[#allocation7 + $0x38] sm:$0xff]
    %v555 = vld [vmem:[#allocation7 + $0x40] sm:$0xff]
    %v556 = vld [vmem:[#allocation7 + $0x48] sm:$0xff]
    %v557 = vld [vmem:[#allocation7 + $0x50] sm:$0xff]
    %v558 = vld [vmem:[#allocation7 + $0x58] sm:$0xff]
    %v559 = vld [vmem:[#allocation7 + $0x60] sm:$0xff]
    %v560 = vld [vmem:[#allocation7 + $0x68] sm:$0xff]
    %v561 = vld [vmem:[#allocation7 + $0x70] sm:$0xff]
    %v562 = vld [vmem:[#allocation7 + $0x78] sm:$0xff]
    %v563 = vld [vmem:[#allocation7 + $0x80] sm:$0xff]
    %v564 = vld [vmem:[#allocation7 + $0x88] sm:$0xff]
    %v565 = vld [vmem:[#allocation7 + $0x90] sm:$0xff]
    %v566 = vld [vmem:[#allocation7 + $0x98] sm:$0xff]
    %v567 = vld [vmem:[#allocation7 + $0xa0] sm:$0xff]
    %v568 = vld [vmem:[#allocation7 + $0xa8] sm:$0xff]
    %v569 = vld [vmem:[#allocation7 + $0xb0] sm:$0xff]
    %v570 = vld [vmem:[#allocation7 + $0xb8] sm:$0xff]
    %v571 = vld [vmem:[#allocation7 + $0xc0] sm:$0xff]
    %v572 = vld [vmem:[#allocation7 + $0xc8] sm:$0xff]
    %v573 = vld [vmem:[#allocation7 + $0xd0] sm:$0xff]
    %v574 = vld [vmem:[#allocation7 + $0xd8] sm:$0xff]
    %v575 = vld [vmem:[#allocation7 + $0xe0] sm:$0xff]
    %v576 = vld [vmem:[#allocation7 + $0xe8] sm:$0xff]
    %v577 = vld [vmem:[#allocation7 + $0xf0] sm:$0xff]
    %v578 = vld [vmem:[#allocation7 + $0xf8] sm:$0xff]
    %v579 = vld [vmem:[%s6] sm:$0x3]
    %v581 = vlaneseq
    %v582 = vshrl.u32 %v581, 7
    %v583 = vsub.s32 0, %v582
    %v584 = vrot.slane %v579, %v583
    %v585 = vlaneseq
    %v586 = vshrl.u32 %v585, 7
    %v587 = vsub.s32 1, %v586
    %v588 = vrot.slane %v579, %v587
    %v623 = vunpack.c.l.b16 %v547
    %v624 = vunpack.c.h.b16 %v547
    %v625 = vunpack.c.l.b16 %v548
    %v626 = vunpack.c.h.b16 %v548
    %v627 = vunpack.c.l.b16 %v549
    %v628 = vunpack.c.h.b16 %v549
    %v629 = vunpack.c.l.b16 %v550
    %v630 = vunpack.c.h.b16 %v550
    %v631 = vunpack.c.l.b16 %v551
    %v632 = vunpack.c.h.b16 %v551
    %v633 = vunpack.c.l.b16 %v552
    %v634 = vunpack.c.h.b16 %v552
    %v635 = vunpack.c.l.b16 %v553
    %v636 = vunpack.c.h.b16 %v553
    %v637 = vunpack.c.l.b16 %v554
    %v638 = vunpack.c.h.b16 %v554
    %v639 = vunpack.c.l.b16 %v555
    %v640 = vunpack.c.h.b16 %v555
    %v641 = vunpack.c.l.b16 %v556
    %v642 = vunpack.c.h.b16 %v556
    %v643 = vunpack.c.l.b16 %v557
    %v644 = vunpack.c.h.b16 %v557
    %v645 = vunpack.c.l.b16 %v558
    %v646 = vunpack.c.h.b16 %v558
    %v647 = vunpack.c.l.b16 %v559
    %v648 = vunpack.c.h.b16 %v559
    %v649 = vunpack.c.l.b16 %v560
    %v650 = vunpack.c.h.b16 %v560
    %v651 = vunpack.c.l.b16 %v561
    %v652 = vunpack.c.h.b16 %v561
    %v653 = vunpack.c.l.b16 %v562
    %v654 = vunpack.c.h.b16 %v562
    %v655 = vunpack.c.l.b16 %v563
    %v656 = vunpack.c.h.b16 %v563
    %v657 = vunpack.c.l.b16 %v564
    %v658 = vunpack.c.h.b16 %v564
    %v659 = vunpack.c.l.b16 %v565
    %v660 = vunpack.c.h.b16 %v565
    %v661 = vunpack.c.l.b16 %v566
    %v662 = vunpack.c.h.b16 %v566
    %v663 = vunpack.c.l.b16 %v567
    %v664 = vunpack.c.h.b16 %v567
    %v665 = vunpack.c.l.b16 %v568
    %v666 = vunpack.c.h.b16 %v568
    %v667 = vunpack.c.l.b16 %v569
    %v668 = vunpack.c.h.b16 %v569
    %v669 = vunpack.c.l.b16 %v570
    %v670 = vunpack.c.h.b16 %v570
    %v671 = vunpack.c.l.b16 %v571
    %v672 = vunpack.c.h.b16 %v571
    %v673 = vunpack.c.l.b16 %v572
    %v674 = vunpack.c.h.b16 %v572
    %v675 = vunpack.c.l.b16 %v573
    %v676 = vunpack.c.h.b16 %v573
    %v677 = vunpack.c.l.b16 %v574
    %v678 = vunpack.c.h.b16 %v574
    %v679 = vunpack.c.l.b16 %v575
    %v680 = vunpack.c.h.b16 %v575
    %v681 = vunpack.c.l.b16 %v576
    %v682 = vunpack.c.h.b16 %v576
    %v683 = vunpack.c.l.b16 %v577
    %v684 = vunpack.c.h.b16 %v577
    %v685 = vunpack.c.l.b16 %v578
    %v686 = vunpack.c.h.b16 %v578
    %v687 = vpack.c.b16 %v625, %v623
    %v688 = vpack.c.b16 %v626, %v624
    %v689 = vpack.c.b16 %v629, %v627
    %v690 = vpack.c.b16 %v630, %v628
    %v691 = vpack.c.b16 %v633, %v631
    %v692 = vpack.c.b16 %v634, %v632
    %v693 = vpack.c.b16 %v637, %v635
    %v694 = vpack.c.b16 %v638, %v636
    %v695 = vpack.c.b16 %v641, %v639
    %v696 = vpack.c.b16 %v642, %v640
    %v697 = vpack.c.b16 %v645, %v643
    %v698 = vpack.c.b16 %v646, %v644
    %v699 = vpack.c.b16 %v649, %v647
    %v700 = vpack.c.b16 %v650, %v648
    %v701 = vpack.c.b16 %v653, %v651
    %v702 = vpack.c.b16 %v654, %v652
    %v703 = vpack.c.b16 %v657, %v655
    %v704 = vpack.c.b16 %v658, %v656
    %v705 = vpack.c.b16 %v661, %v659
    %v706 = vpack.c.b16 %v662, %v660
    %v707 = vpack.c.b16 %v665, %v663
    %v708 = vpack.c.b16 %v666, %v664
    %v709 = vpack.c.b16 %v669, %v667
    %v710 = vpack.c.b16 %v670, %v668
    %v711 = vpack.c.b16 %v673, %v671
    %v712 = vpack.c.b16 %v674, %v672
    %v713 = vpack.c.b16 %v677, %v675
    %v714 = vpack.c.b16 %v678, %v676
    %v715 = vpack.c.b16 %v681, %v679
    %v716 = vpack.c.b16 %v682, %v680
    %v717 = vpack.c.b16 %v685, %v683
    %v718 = vpack.c.b16 %v686, %v684
    %751 = vmatprep.subr.bf16.mxu0 %v688
    %752 = vmatpush1.bf16.msra.mxu0 %v687
    %753 = vmatprep.subr.bf16.mxu0 %v690
    %754 = vmatpush1.bf16.msra.mxu0 %v689
    %755 = vmatprep.subr.bf16.mxu0 %v692
    %756 = vmatpush1.bf16.msra.mxu0 %v691
    %757 = vmatprep.subr.bf16.mxu0 %v694
    %758 = vmatpush1.bf16.msra.mxu0 %v693
    %759 = vmatprep.subr.bf16.mxu0 %v696
    %760 = vmatpush1.bf16.msra.mxu0 %v695
    %761 = vmatprep.subr.bf16.mxu0 %v698
    %762 = vmatpush1.bf16.msra.mxu0 %v697
    %763 = vmatprep.subr.bf16.mxu0 %v700
    %764 = vmatpush1.bf16.msra.mxu0 %v699
    %765 = vmatprep.subr.bf16.mxu0 %v702
    %766 = vmatpush1.bf16.msra.mxu0 %v701
    %767 = vmatprep.subr.bf16.mxu0 %v704
    %768 = vmatpush1.bf16.msra.mxu0 %v703
    %769 = vmatprep.subr.bf16.mxu0 %v706
    %770 = vmatpush1.bf16.msra.mxu0 %v705
    %771 = vmatprep.subr.bf16.mxu0 %v708
    %772 = vmatpush1.bf16.msra.mxu0 %v707
    %773 = vmatprep.subr.bf16.mxu0 %v710
    %774 = vmatpush1.bf16.msra.mxu0 %v709
    %775 = vmatprep.subr.bf16.mxu0 %v712
    %776 = vmatpush1.bf16.msra.mxu0 %v711
    %777 = vmatprep.subr.bf16.mxu0 %v714
    %778 = vmatpush1.bf16.msra.mxu0 %v713
    %779 = vmatprep.subr.bf16.mxu0 %v716
    %780 = vmatpush1.bf16.msra.mxu0 %v715
    %781 = vmatprep.subr.bf16.mxu0 %v718
    %782 = vmatpush1.bf16.msra.mxu0 %v717
    %783 = vmatprep.mubr.bf16.mxu0 %v544
    %784 = vmatmul.mubr.bf16.gmra.mrb[0].mxu0 %v543
    %v785 = vpop.f32.mrb[0].mxu0
    %v786 = vadd.f32 %v584, %v785
    %v787 = vpop.f32.mrb[0].mxu0
    %v788 = vadd.f32 %v588, %v787
    %v789 = vpop.f32.mrb[0].mxu0
    %v790 = vadd.f32 %v584, %v789
    %v791 = vpop.f32.mrb[0].mxu0
    %v792 = vadd.f32 %v588, %v791
    %793 = vmatprep.mubr.bf16.mxu0 %v546
    %794 = vmatmul.mubr.bf16.gmra.mrb[0].mxu0 %v545
    %v795 = vpop.f32.mrb[0].mxu0
    %v796 = vadd.f32 %v584, %v795
    %v797 = vpop.f32.mrb[0].mxu0
    %v798 = vadd.f32 %v588, %v797
    %v799 = vpop.f32.mrb[0].mxu0
    %v800 = vadd.f32 %v584, %v799
    %v801 = vpop.f32.mrb[0].mxu0
    %v802 = vadd.f32 %v588, %v801
    %803 = vdwg.mxu0
    %v804 = vmax.f32 %v786, 0.0
    %v805 = vmax.f32 %v788, 0.0
    %v806 = vmax.f32 %v790, 0.0
    %v807 = vmax.f32 %v792, 0.0
    %v808 = vmax.f32 %v796, 0.0
    %v809 = vmax.f32 %v798, 0.0
    %v810 = vmax.f32 %v800, 0.0
    %v811 = vmax.f32 %v802, 0.0
    %v812 = vpack.c.bf16 %v806, %v804
    %v813 = vpack.c.bf16 %v807, %v805
    %v814 = vpack.c.bf16 %v810, %v808
    %v815 = vpack.c.bf16 %v811, %v809
    %v816 = vld [vmem:[#allocation8] sm:$0xf]
    %v817 = vld [vmem:[#allocation8 + $0x4] sm:$0xf]
    %v818 = vld [vmem:[#allocation8 + $0x8] sm:$0xf]
    %v819 = vld [vmem:[#allocation8 + $0xc] sm:$0xf]
    %v820 = vld [vmem:[#allocation8 + $0x10] sm:$0xf]
    %v821 = vld [vmem:[#allocation8 + $0x14] sm:$0xf]
    %v822 = vld [vmem:[#allocation8 + $0x18] sm:$0xf]
    %v823 = vld [vmem:[#allocation8 + $0x1c] sm:$0xf]
    %v824 = vld [vmem:[#allocation8 + $0x20] sm:$0xf]
    %v825 = vld [vmem:[#allocation8 + $0x24] sm:$0xf]
    %v826 = vld [vmem:[#allocation8 + $0x28] sm:$0xf]
    %v827 = vld [vmem:[#allocation8 + $0x2c] sm:$0xf]
    %v828 = vld [vmem:[#allocation8 + $0x30] sm:$0xf]
    %v829 = vld [vmem:[#allocation8 + $0x34] sm:$0xf]
    %v830 = vld [vmem:[#allocation8 + $0x38] sm:$0xf]
    %v831 = vld [vmem:[#allocation8 + $0x3c] sm:$0xf]
    %v832 = vld [vmem:[#allocation8 + $0x40] sm:$0xf]
    %v833 = vld [vmem:[#allocation8 + $0x44] sm:$0xf]
    %v834 = vld [vmem:[#allocation8 + $0x48] sm:$0xf]
    %v835 = vld [vmem:[#allocation8 + $0x4c] sm:$0xf]
    %v836 = vld [vmem:[#allocation8 + $0x50] sm:$0xf]
    %v837 = vld [vmem:[#allocation8 + $0x54] sm:$0xf]
    %v838 = vld [vmem:[#allocation8 + $0x58] sm:$0xf]
    %v839 = vld [vmem:[#allocation8 + $0x5c] sm:$0xf]
    %v840 = vld [vmem:[#allocation8 + $0x60] sm:$0xf]
    %v841 = vld [vmem:[#allocation8 + $0x64] sm:$0xf]
    %v842 = vld [vmem:[#allocation8 + $0x68] sm:$0xf]
    %v843 = vld [vmem:[#allocation8 + $0x6c] sm:$0xf]
    %v844 = vld [vmem:[#allocation8 + $0x70] sm:$0xf]
    %v845 = vld [vmem:[#allocation8 + $0x74] sm:$0xf]
    %v846 = vld [vmem:[#allocation8 + $0x78] sm:$0xf]
    %v847 = vld [vmem:[#allocation8 + $0x7c] sm:$0xf]
    %v848 = vld [vmem:[%s8] sm:$0x1]
    %v850 = vlaneseq
    %v851 = vshrl.u32 %v850, 7
    %v852 = vsub.s32 0, %v851
    %v853 = vrot.slane %v848, %v852
    %v887 = vunpack.c.l.b16 %v816
    %v888 = vunpack.c.l.b16 %v817
    %v889 = vunpack.c.l.b16 %v818
    %v890 = vunpack.c.l.b16 %v819
    %v891 = vunpack.c.l.b16 %v820
    %v892 = vunpack.c.l.b16 %v821
    %v893 = vunpack.c.l.b16 %v822
    %v894 = vunpack.c.l.b16 %v823
    %v895 = vunpack.c.l.b16 %v824
    %v896 = vunpack.c.l.b16 %v825
    %v897 = vunpack.c.l.b16 %v826
    %v898 = vunpack.c.l.b16 %v827
    %v899 = vunpack.c.l.b16 %v828
    %v900 = vunpack.c.l.b16 %v829
    %v901 = vunpack.c.l.b16 %v830
    %v902 = vunpack.c.l.b16 %v831
    %v903 = vunpack.c.l.b16 %v832
    %v904 = vunpack.c.l.b16 %v833
    %v905 = vunpack.c.l.b16 %v834
    %v906 = vunpack.c.l.b16 %v835
    %v907 = vunpack.c.l.b16 %v836
    %v908 = vunpack.c.l.b16 %v837
    %v909 = vunpack.c.l.b16 %v838
    %v910 = vunpack.c.l.b16 %v839
    %v911 = vunpack.c.l.b16 %v840
    %v912 = vunpack.c.l.b16 %v841
    %v913 = vunpack.c.l.b16 %v842
    %v914 = vunpack.c.l.b16 %v843
    %v915 = vunpack.c.l.b16 %v844
    %v916 = vunpack.c.l.b16 %v845
    %v917 = vunpack.c.l.b16 %v846
    %v918 = vunpack.c.l.b16 %v847
    %v919 = vpack.c.b16 %v888, %v887
    %v920 = vpack.c.b16 %v890, %v889
    %v921 = vpack.c.b16 %v892, %v891
    %v922 = vpack.c.b16 %v894, %v893
    %v923 = vpack.c.b16 %v896, %v895
    %v924 = vpack.c.b16 %v898, %v897
    %v925 = vpack.c.b16 %v900, %v899
    %v926 = vpack.c.b16 %v902, %v901
    %v927 = vpack.c.b16 %v904, %v903
    %v928 = vpack.c.b16 %v906, %v905
    %v929 = vpack.c.b16 %v908, %v907
    %v930 = vpack.c.b16 %v910, %v909
    %v931 = vpack.c.b16 %v912, %v911
    %v932 = vpack.c.b16 %v914, %v913
    %v933 = vpack.c.b16 %v916, %v915
    %v934 = vpack.c.b16 %v918, %v917
    %951 = vmatprep.subr.bf16.mxu0 0
    %952 = vmatpush1.bf16.msra.mxu0 %v919
    %953 = vmatprep.subr.bf16.mxu0 0
    %954 = vmatpush1.bf16.msra.mxu0 %v920
    %955 = vmatprep.subr.bf16.mxu0 0
    %956 = vmatpush1.bf16.msra.mxu0 %v921
    %957 = vmatprep.subr.bf16.mxu0 0
    %958 = vmatpush1.bf16.msra.mxu0 %v922
    %959 = vmatprep.subr.bf16.mxu0 0
    %960 = vmatpush1.bf16.msra.mxu0 %v923
    %961 = vmatprep.subr.bf16.mxu0 0
    %962 = vmatpush1.bf16.msra.mxu0 %v924
    %963 = vmatprep.subr.bf16.mxu0 0
    %964 = vmatpush1.bf16.msra.mxu0 %v925
    %965 = vmatprep.subr.bf16.mxu0 0
    %966 = vmatpush1.bf16.msra.mxu0 %v926
    %967 = vmatprep.subr.bf16.mxu0 0
    %968 = vmatpush1.bf16.msra.mxu0 %v927
    %969 = vmatprep.subr.bf16.mxu0 0
    %970 = vmatpush1.bf16.msra.mxu0 %v928
    %971 = vmatprep.subr.bf16.mxu0 0
    %972 = vmatpush1.bf16.msra.mxu0 %v929
    %973 = vmatprep.subr.bf16.mxu0 0
    %974 = vmatpush1.bf16.msra.mxu0 %v930
    %975 = vmatprep.subr.bf16.mxu0 0
    %976 = vmatpush1.bf16.msra.mxu0 %v931
    %977 = vmatprep.subr.bf16.mxu0 0
    %978 = vmatpush1.bf16.msra.mxu0 %v932
    %979 = vmatprep.subr.bf16.mxu0 0
    %980 = vmatpush1.bf16.msra.mxu0 %v933
    %981 = vmatprep.subr.bf16.mxu0 0
    %982 = vmatpush1.bf16.msra.mxu0 %v934
    %983 = vmatprep.mubr.bf16.mxu0 %v813
    %984 = vmatmul.mubr.bf16.gmra.mrb[0].mxu0 %v812
    %v985 = vpop.f32.mrb[0].mxu0
    %v986 = vadd.f32 %v853, %v985
    %v987 = vpop.f32.mrb[0].mxu0
    %v988 = vpop.f32.mrb[0].mxu0
    %v989 = vadd.f32 %v853, %v988
    %v990 = vpop.f32.mrb[0].mxu0
    %991 = vmatprep.mubr.bf16.mxu0 %v815
    %992 = vmatmul.mubr.bf16.gmra.mrb[0].mxu0 %v814
    %v993 = vpop.f32.mrb[0].mxu0
    %v994 = vadd.f32 %v853, %v993
    %v995 = vpop.f32.mrb[0].mxu0
    %v996 = vpop.f32.mrb[0].mxu0
    %v997 = vadd.f32 %v853, %v996
    %v998 = vpop.f32.mrb[0].mxu0
    %999 = vdwg.mxu0
    %1000 = vst [vmem:[#allocation10] sm:$0xff] %v986
    %1001 = vst [vmem:[#allocation10 + $0x8] sm:$0xff] %v989
    %1002 = vst [vmem:[#allocation10 + $0x10] sm:$0xff] %v994
    %1003 = vst [vmem:[#allocation10 + $0x18] sm:$0xff] %v997
    // Predicated region
    $region54: #{pose_prediction_forward.1} parent=1 // pred_check
      _
    $region55: #{pose_prediction_forward.1} parent=1 // pred_check_branch
      %1005 = sbr.rel (0) target = $region57
    $region56: #{pose_prediction_forward.1} parent=1 // pred_region
      %s1007 = ssub.s32 512, 512
      %1008 = vsyncadd [#allocation4], %s1007
      %s1009 = sshll.u32 [#allocation10], 4
      %s1010 = int_to_ptr.vmem [resolvable:$true] %s1009
      %1015 = dma.vmem_to_hbm [thread:$0]  %s1010, 512, %s9, [#allocation4], 128, 128, 8
    $region57: #{pose_prediction_forward.1} parent=1 // pred_fallthru
      _
    // Predicated region
    $region58: #{pose_prediction_forward.1} parent=1 // pred_check
      _
    $region59: #{pose_prediction_forward.1} parent=1 // pred_check_branch
      %1017 = sbr.rel (0) target = $region61
    $region60: #{pose_prediction_forward.1} parent=1 // pred_region
      %1018 = dma.done [#allocation4], 512
    $region61: #{pose_prediction_forward.1} parent=1 // pred_fallthru
      _
    %1019 = vsyncpa [#allocation3], 1
    %1020 = vsyncpa [#allocation6], 1
    %1021 = vsyncpa [#allocation9], 1
    %1022 = vsyncpa [#allocation4], 1

</llo_original>
